<compile_context>
chip_gen: v7x
topology: tpu7x:2x2x1
jax: 0.10.0
libtpu: 0.0.40
codegen_flags: <defaults>
</compile_context>

<pallas_src>
import functools

import jax
import jax.numpy as jnp
from jax import lax
from jax.experimental import pallas as pl
from jax.experimental.pallas import tpu as pltpu

_LANE = 128
_FOLD_SUB = 32          # accumulator sublanes: (32,128) f32 = 4 vregs
_CHUNK_ROWS = 512       # in-kernel compute strip: 256 KiB f32 per input
_MAX_BLOCK_ROWS = 16384  # hard cap (8 MiB f32 per input per buffer)


def _ceil_div(a, b):
    return -(-a // b)


def _round_up(a, b):
    return _ceil_div(a, b) * b


@functools.lru_cache(maxsize=1)
def _tpu_params():
    """(vmem_capacity_bytes, num_tensorcores) with conservative fallbacks."""
    vmem_bytes = 64 << 20   # conservative (v7x-sized); works on all generations
    num_cores = 1
    try:
        info = pltpu.get_tpu_info()
        vmem_bytes = int(getattr(info, "vmem_capacity_bytes", vmem_bytes)) or vmem_bytes
        for name in ("num_tensorcores", "tensorcore_count", "num_cores", "core_count"):
            val = getattr(info, name, None)
            if val:
                num_cores = int(val)
                break
    except Exception:
        pass   # keep conservative defaults
    return vmem_bytes, num_cores


def _plan(n, num_inputs, itemsize):
    """Static tiling plan.

    Returns (slab_rows, block_rows, chunk_rows, parts, blocks_per_part,
             vmem_limit_bytes)."""
    vmem_bytes, num_cores = _tpu_params()

    rows = max(_ceil_div(n, _LANE), 1)
    # Tiny inputs are zero-padded up to one fold group (<=16 KiB, negligible).
    slab_rows = max(rows, _FOLD_SUB)

    # Largest double-buffered input window that fits comfortably in VMEM.
    budget = int(vmem_bytes * 0.3)
    per_row = num_inputs * 2 * _LANE * itemsize
    max_block = max(_CHUNK_ROWS, min(_MAX_BLOCK_ROWS, budget // per_row))
    max_block = (max_block // _CHUNK_ROWS) * _CHUNK_ROWS

    # Block never exceeds the slab (standard partial-boundary-block territory);
    # grain keeps block_rows a multiple of the fold/chunk size (and of 32 for
    # packed-dtype sublane tiling).
    grain = _CHUNK_ROWS if slab_rows >= _CHUNK_ROWS else _FOLD_SUB
    block_rows = min(max_block, (slab_rows // grain) * grain)
    chunk_rows = min(_CHUNK_ROWS, block_rows)

    num_blocks = _ceil_div(slab_rows, block_rows)
    # Only shard across cores when it divides evenly (no fully-OOB blocks).
    parts = num_cores if (num_cores > 1 and num_blocks % num_cores == 0) else 1
    blocks_per_part = num_blocks // parts

    window = num_inputs * 2 * block_rows * _LANE * itemsize
    vmem_limit = max(32 << 20, min(int(vmem_bytes * 0.9), window + (16 << 20)))
    return slab_rows, block_rows, chunk_rows, parts, blocks_per_part, vmem_limit


def _slab(x, slab_rows):
    """Flatten to a lane-dense (slab_rows, 128) slab (pad only if required)."""
    flat = x.reshape(-1)
    need = slab_rows * _LANE
    if flat.shape[0] != need:
        # Only for numel % 128 != 0 (<128 pad elems) or tiny inputs; zero
        # padding is exact for both the unweighted and weighted sums.
        # TODO(synk): stream the sub-128 tail separately to avoid this copy.
        flat = jnp.pad(flat, (0, need - flat.shape[0]))
    return flat.reshape(slab_rows, _LANE)


def _make_kernel(*, weighted, block_rows, chunk_rows, total_rows,
                 blocks_per_part, two_axis, unroll):
    chunks = block_rows // chunk_rows

    def kernel(*refs):
        if weighted:
            p_ref, t_ref, w_ref, o_ref = refs
        else:
            p_ref, t_ref, o_ref = refs
            w_ref = None

        if two_axis:
            k = pl.program_id(1)
            blk = pl.program_id(0) * blocks_per_part + k
        else:
            k = pl.program_id(0)
            blk = k

        @pl.when(k == 0)
        def _():
            o_ref[...] = jnp.zeros_like(o_ref)

        block_row0 = blk * block_rows

        def chunk_diff(c):
            r0 = pl.multiple_of(c * chunk_rows, chunk_rows)
            d = jnp.abs(p_ref[pl.ds(r0, chunk_rows), :].astype(jnp.float32)
                        - t_ref[pl.ds(r0, chunk_rows), :].astype(jnp.float32))
            if weighted:
                d = d * w_ref[pl.ds(r0, chunk_rows), :].astype(jnp.float32)
            return d, r0

        def fold(d):
            # (chunk_rows,128) f32 -> (32,128): VPU adds only.
            return jnp.sum(d.reshape(-1, _FOLD_SUB, _LANE), axis=0)

        acc0 = jnp.zeros((_FOLD_SUB, _LANE), jnp.float32)

        # Interior block: fully inside the data, no masking cost.
        @pl.when(block_row0 + block_rows <= total_rows)
        def _():
            def body(c, acc):
                d, _ = chunk_diff(c)
                return acc + fold(d)
            o_ref[...] += lax.fori_loop(0, chunks, body, acc0, unroll=unroll)

        # Boundary block: mask rows beyond the real data (OOB VMEM is garbage).
        @pl.when(block_row0 + block_rows > total_rows)
        def _():
            row = lax.broadcasted_iota(jnp.int32, (chunk_rows, _LANE), 0)
            def body(c, acc):
                d, r0 = chunk_diff(c)
                valid = row < (total_rows - block_row0 - r0)
                return acc + fold(jnp.where(valid, d, 0.0))
            o_ref[...] += lax.fori_loop(0, chunks, body, acc0, unroll=unroll)

    return kernel


def _l1_partial_total(operands):
    """sum(|pred - target| [* weight]) over all elements via Pallas."""
    operands = tuple(operands)
    n = operands[0].size
    itemsize = max(jnp.dtype(x.dtype).itemsize for x in operands)
    (slab_rows, block_rows, chunk_rows, parts, blocks_per_part,
     vmem_limit) = _plan(n, len(operands), itemsize)

    slabs = [_slab(x, slab_rows) for x in operands]
    chunks = block_rows // chunk_rows

    kernel = _make_kernel(
        weighted=(len(operands) == 3),
        block_rows=block_rows, chunk_rows=chunk_rows, total_rows=slab_rows,
        blocks_per_part=blocks_per_part, two_axis=(parts > 1),
        unroll=(chunks <= 8))

    if parts > 1:
        grid = (parts, blocks_per_part)
        in_index = lambda p, k: (p * blocks_per_part + k, 0)
        out_index = lambda p, k: (p, 0, 0)
        semantics = (pltpu.CORE_PARALLEL, pltpu.ARBITRARY)
    else:
        grid = (blocks_per_part,)
        in_index = lambda k: (k, 0)
        out_index = lambda k: (0, 0, 0)
        semantics = ("arbitrary",)

    in_specs = [pl.BlockSpec((block_rows, _LANE), in_index) for _ in slabs]
    out_specs = pl.BlockSpec((None, _FOLD_SUB, _LANE), out_index)

    in_bytes = sum(s.size * jnp.dtype(s.dtype).itemsize for s in slabs)
    cost = pl.CostEstimate(
        flops=(1 + len(operands)) * slab_rows * _LANE,
        transcendentals=0,
        bytes_accessed=in_bytes + parts * _FOLD_SUB * _LANE * 4)

    partials = pl.pallas_call(
        kernel,
        out_shape=jax.ShapeDtypeStruct((parts, _FOLD_SUB, _LANE), jnp.float32),
        grid_spec=pltpu.PrefetchScalarGridSpec(
            num_scalar_prefetch=0,
            grid=grid,
            in_specs=in_specs,
            out_specs=out_specs),
        compiler_params=pltpu.CompilerParams(
            dimension_semantics=semantics,
            vmem_limit_bytes=int(vmem_limit)),
        cost_estimate=cost,
    )(*slabs)
    # Single cheap cross-lane reduction over the tiny (parts, 32, 128) partials.
    return jnp.sum(partials)


def _finalize(total, n, loss_weight, reduction):
    if reduction == "mean":
        # basicsr divides by the element count even when a weight is given.
        total = total / jnp.float32(n)
    return jnp.float32(loss_weight) * total


@functools.partial(jax.jit, static_argnames=("loss_weight", "reduction"))
def _l1_loss_unweighted(pred, target, *, loss_weight, reduction):
    total = _l1_partial_total((pred, target))
    return _finalize(total, pred.size, loss_weight, reduction)


@functools.partial(jax.jit, static_argnames=("loss_weight", "reduction"))
def _l1_loss_weighted(pred, target, weight, *, loss_weight, reduction):
    if weight.size == 1:
        # Scalar weight: fold into the final scale (exact), no third stream.
        total = _l1_partial_total((pred, target))
        total = total * weight.reshape(()).astype(jnp.float32)
    else:
        if weight.shape != pred.shape:
            # TODO(synk): stream small broadcastable weights (e.g. per-channel)
            # via a dedicated small BlockSpec instead of materializing this.
            weight = jnp.broadcast_to(weight, pred.shape)
        total = _l1_partial_total((pred, target, weight))
    return _finalize(total, pred.size, loss_weight, reduction)


class L1Loss:
    """JAX/Pallas port of basicsr L1Loss (reduction='mean' or 'sum')."""

    def __init__(self, loss_weight=1.0, reduction="mean"):
        if reduction not in ("mean", "sum"):
            # TODO(synk): reduction='none' (elementwise output) not wired up.
            raise ValueError(f"Unsupported reduction: {reduction}")
        self.loss_weight = float(loss_weight)
        self.reduction = reduction

    def __call__(self, pred, target, weight=None):
        if weight is None:
            return _l1_loss_unweighted(
                pred, target,
                loss_weight=self.loss_weight, reduction=self.reduction)
        return _l1_loss_weighted(
            pred, target, weight,
            loss_weight=self.loss_weight, reduction=self.reduction)


if __name__ == "__main__":
    key = jax.random.PRNGKey(0)
    k1, k2, k3, k4, k5, k6, k7, k8 = jax.random.split(key, 8)

    loss_mean = L1Loss(loss_weight=1.0, reduction="mean")
    loss_sum = L1Loss(loss_weight=0.5, reduction="sum")

    # Small NCHW test (tiny-slab path, single block).
    B, C, H, W = 2, 4, 16, 16
    pred = jax.random.normal(k1, (B, C, H, W), dtype=jnp.float32)
    target = jax.random.normal(k2, (B, C, H, W), dtype=jnp.float32)
    weight = jax.random.uniform(k3, (B, C, H, W), dtype=jnp.float32)

    out = jax.block_until_ready(loss_mean(pred, target))
    ref = jnp.mean(jnp.abs(pred - target))
    assert jnp.allclose(out, ref, rtol=1e-5, atol=1e-5), (out, ref)

    out_w = jax.block_until_ready(loss_mean(pred, target, weight))
    ref_w = jnp.mean(jnp.abs(pred - target) * weight)
    assert jnp.allclose(out_w, ref_w, rtol=1e-5, atol=1e-5), (out_w, ref_w)

    out_s = jax.block_until_ready(loss_sum(pred, target))
    ref_s = 0.5 * jnp.sum(jnp.abs(pred - target))
    assert jnp.allclose(out_s, ref_s, rtol=1e-5, atol=1e-5), (out_s, ref_s)

    # Medium test (single full block, multi-chunk inner loop).
    pred2 = jax.random.normal(k4, (2, 4, 128, 128), dtype=jnp.float32)
    target2 = jax.random.normal(k5, (2, 4, 128, 128), dtype=jnp.float32)
    out2 = jax.block_until_ready(loss_mean(pred2, target2))
    ref2 = jnp.mean(jnp.abs(pred2 - target2))
    assert jnp.allclose(out2, ref2, rtol=1e-4, atol=1e-4), (out2, ref2)

    # Larger test exercising the multi-block grid and boundary-block masking.
    pred3 = jax.random.normal(k6, (4, 4, 520, 512), dtype=jnp.float32)
    target3 = jax.random.normal(k7, (4, 4, 520, 512), dtype=jnp.float32)
    out3 = jax.block_until_ready(loss_mean(pred3, target3))
    ref3 = jnp.mean(jnp.abs(pred3 - target3))
    assert jnp.allclose(out3, ref3, rtol=1e-4, atol=1e-4), (out3, ref3)

    # Ragged test (numel % 128 != 0 -> small zero pad, exact).
    pred4 = jax.random.normal(k8, (3, 3, 10, 7), dtype=jnp.float32)
    target4 = jnp.zeros_like(pred4)
    out4 = jax.block_until_ready(loss_mean(pred4, target4))
    ref4 = jnp.mean(jnp.abs(pred4))
    assert jnp.allclose(out4, ref4, rtol=1e-5, atol=1e-5), (out4, ref4)

    print("KERNEL_OK")
</pallas_src>

<mosaic_0001>
module attributes {stable_mosaic.version = 11 : i64} {
  func.func @kernel(%arg0: i32, %arg1: memref<32x128xf32, #tpu.memory_space<vmem>>, %arg2: memref<32x128xf32, #tpu.memory_space<vmem>>, %arg3: memref<1x32x128xf32, #tpu.memory_space<vmem>>) attributes {dimension_semantics = [#tpu.dimension_semantics<arbitrary>], iteration_bounds = array<i64: 1>, scalar_prefetch = 0 : i64, scratch_operands = 0 : i64, tpu.core_type = #tpu.core_type<tc>, window_params = [{transform_indices = @transform_0, window_bounds = array<i64: 32, 128>}, {transform_indices = @transform_1, window_bounds = array<i64: 32, 128>}, {pipeline_mode = #tpu.pipeline_mode<synchronous>, transform_indices = @transform_2, window_bounds = array<i64: 1, 32, 128>}]} {
    %c0_i32 = arith.constant 0 : i32
    %0 = arith.cmpi eq, %arg0, %c0_i32 : i32
    %1 = arith.extui %0 : i1 to i32
    %c0_i32_0 = arith.constant 0 : i32
    %2 = arith.cmpi ne, %1, %c0_i32_0 : i32
    scf.if %2 {
      %cst_7 = arith.constant 0.000000e+00 : f32
      %13 = vector.broadcast %cst_7 : f32 to vector<32x128xf32>
      %c0 = arith.constant 0 : index
      %c0_8 = arith.constant 0 : index
      %c0_9 = arith.constant 0 : index
      %14 = vector.load %arg3[%c0, %c0_8, %c0_9] : memref<1x32x128xf32, #tpu.memory_space<vmem>>, vector<1x32x128xf32>
      %15 = vector.shape_cast %14 : vector<1x32x128xf32> to vector<32x128xf32>
      %16 = vector.shape_cast %13 : vector<32x128xf32> to vector<1x32x128xf32>
      tpu.vector_store %arg3[%c0, %c0_8, %c0_9], %16 {strides = array<i32>} : memref<1x32x128xf32, #tpu.memory_space<vmem>>, vector<1x32x128xf32>,
    } else {
    }
    %c32_i32 = arith.constant 32 : i32
    %3 = arith.muli %arg0, %c32_i32 : i32
    %cst = arith.constant 0.000000e+00 : f32
    %4 = vector.broadcast %cst : f32 to vector<32x128xf32>
    %c32_i32_1 = arith.constant 32 : i32
    %5 = arith.addi %3, %c32_i32_1 : i32
    %c32_i32_2 = arith.constant 32 : i32
    %6 = arith.cmpi sle, %5, %c32_i32_2 : i32
    %7 = arith.extui %6 : i1 to i32
    %c0_i32_3 = arith.constant 0 : i32
    %8 = arith.cmpi ne, %7, %c0_i32_3 : i32
    scf.if %8 {
      %c0 = arith.constant 0 : index
      %c0_7 = arith.constant 0 : index
      %c0_8 = arith.constant 0 : index
      %13 = vector.load %arg3[%c0, %c0_7, %c0_8] : memref<1x32x128xf32, #tpu.memory_space<vmem>>, vector<1x32x128xf32>
      %14 = vector.shape_cast %13 : vector<1x32x128xf32> to vector<32x128xf32>
      %c0_i32_9 = arith.constant 0 : i32
      %c32_i32_10 = arith.constant 32 : i32
      %15 = arith.muli %c0_i32_9, %c32_i32_10 : i32
      %16 = tpu.assume_multiple %15, 32 : i32
      %17 = arith.index_cast %16 : i32 to index
      %c0_11 = arith.constant 0 : index
      %18 = vector.load %arg1[%17, %c0_11] : memref<32x128xf32, #tpu.memory_space<vmem>>, vector<32x128xf32>
      %19 = arith.index_cast %16 : i32 to index
      %c0_12 = arith.constant 0 : index
      %20 = vector.load %arg2[%19, %c0_12] : memref<32x128xf32, #tpu.memory_space<vmem>>, vector<32x128xf32>
      %21 = arith.subf %18, %20 : vector<32x128xf32>
      %22 = math.absf %21 : vector<32x128xf32>
      %23 = vector.shape_cast %22 : vector<32x128xf32> to vector<1x32x128xf32>
      %cst_13 = arith.constant dense<0.000000e+00> : vector<32x128xf32>
      %24 = vector.multi_reduction <add>, %23, %cst_13 [0] : vector<1x32x128xf32> to vector<32x128xf32>
      %25 = arith.addf %4, %24 : vector<32x128xf32>
      %c1_i32 = arith.constant 1 : i32
      %26 = arith.addf %14, %25 : vector<32x128xf32>
      %c0_14 = arith.constant 0 : index
      %c0_15 = arith.constant 0 : index
      %c0_16 = arith.constant 0 : index
      %27 = vector.load %arg3[%c0_14, %c0_15, %c0_16] : memref<1x32x128xf32, #tpu.memory_space<vmem>>, vector<1x32x128xf32>
      %28 = vector.shape_cast %27 : vector<1x32x128xf32> to vector<32x128xf32>
      %29 = vector.shape_cast %26 : vector<32x128xf32> to vector<1x32x128xf32>
      tpu.vector_store %arg3[%c0_14, %c0_15, %c0_16], %29 {strides = array<i32>} : memref<1x32x128xf32, #tpu.memory_space<vmem>>, vector<1x32x128xf32>,
    } else {
    }
    %c32_i32_4 = arith.constant 32 : i32
    %9 = arith.addi %3, %c32_i32_4 : i32
    %c32_i32_5 = arith.constant 32 : i32
    %10 = arith.cmpi sgt, %9, %c32_i32_5 : i32
    %11 = arith.extui %10 : i1 to i32
    %c0_i32_6 = arith.constant 0 : i32
    %12 = arith.cmpi ne, %11, %c0_i32_6 : i32
    scf.if %12 {
      %13 = tpu.iota {dimensions = array<i32: 0>} : vector<32x128xi32>
      %c0 = arith.constant 0 : index
      %c0_7 = arith.constant 0 : index
      %c0_8 = arith.constant 0 : index
      %14 = vector.load %arg3[%c0, %c0_7, %c0_8] : memref<1x32x128xf32, #tpu.memory_space<vmem>>, vector<1x32x128xf32>
      %15 = vector.shape_cast %14 : vector<1x32x128xf32> to vector<32x128xf32>
      %c0_i32_9 = arith.constant 0 : i32
      %c32_i32_10 = arith.constant 32 : i32
      %16 = arith.muli %c0_i32_9, %c32_i32_10 : i32
      %17 = tpu.assume_multiple %16, 32 : i32
      %18 = arith.index_cast %17 : i32 to index
      %c0_11 = arith.constant 0 : index
      %19 = vector.load %arg1[%18, %c0_11] : memref<32x128xf32, #tpu.memory_space<vmem>>, vector<32x128xf32>
      %20 = arith.index_cast %17 : i32 to index
      %c0_12 = arith.constant 0 : index
      %21 = vector.load %arg2[%20, %c0_12] : memref<32x128xf32, #tpu.memory_space<vmem>>, vector<32x128xf32>
      %22 = arith.subf %19, %21 : vector<32x128xf32>
      %23 = math.absf %22 : vector<32x128xf32>
      %c32_i32_13 = arith.constant 32 : i32
      %24 = arith.subi %c32_i32_13, %3 : i32
      %25 = arith.subi %24, %17 : i32
      %26 = vector.broadcast %25 : i32 to vector<32x128xi32>
      %27 = arith.cmpi slt, %13, %26 : vector<32x128xi32>
      %cst_14 = arith.constant 0.000000e+00 : f32
      %28 = vector.broadcast %cst_14 : f32 to vector<32x128xf32>
      %29 = arith.select %27, %23, %28 : vector<32x128xi1>, vector<32x128xf32>
      %30 = vector.shape_cast %29 : vector<32x128xf32> to vector<1x32x128xf32>
      %cst_15 = arith.constant dense<0.000000e+00> : vector<32x128xf32>
      %31 = vector.multi_reduction <add>, %30, %cst_15 [0] : vector<1x32x128xf32> to vector<32x128xf32>
      %32 = arith.addf %4, %31 : vector<32x128xf32>
      %c1_i32 = arith.constant 1 : i32
      %33 = arith.addf %15, %32 : vector<32x128xf32>
      %c0_16 = arith.constant 0 : index
      %c0_17 = arith.constant 0 : index
      %c0_18 = arith.constant 0 : index
      %34 = vector.load %arg3[%c0_16, %c0_17, %c0_18] : memref<1x32x128xf32, #tpu.memory_space<vmem>>, vector<1x32x128xf32>
      %35 = vector.shape_cast %34 : vector<1x32x128xf32> to vector<32x128xf32>
      %36 = vector.shape_cast %33 : vector<32x128xf32> to vector<1x32x128xf32>
      tpu.vector_store %arg3[%c0_16, %c0_17, %c0_18], %36 {strides = array<i32>} : memref<1x32x128xf32, #tpu.memory_space<vmem>>, vector<1x32x128xf32>,
    } else {
    }
    return
  }
  func.func @transform_0(%arg0: i32) -> (i32, i32) {
    %c0_i32 = arith.constant 0 : i32
    %c0_i32_0 = arith.constant 0 : i32
    return %arg0, %c0_i32 : i32, i32
  }
  func.func @transform_1(%arg0: i32) -> (i32, i32) {
    %c0_i32 = arith.constant 0 : i32
    %c0_i32_0 = arith.constant 0 : i32
    return %arg0, %c0_i32 : i32, i32
  }
  func.func @transform_2(%arg0: i32) -> (i32, i32, i32) {
    %c0_i32 = arith.constant 0 : i32
    %c0_i32_0 = arith.constant 0 : i32
    %c0_i32_1 = arith.constant 0 : i32
    %c0_i32_2 = arith.constant 0 : i32
    return %c0_i32, %c0_i32_0, %c0_i32_1 : i32, i32, i32
  }
}

</mosaic_0001>

<llo_original>
// kernel: _l1_loss_unweighted.1
$region0: #{_l1_loss_unweighted.1}
  #allocation0 [shape = 'u32[]', space=smem, size = 0x4, offset = 0x4, fixed_abs, tag = 'smem constant byte address 0x4 - core index']
  #allocation1 [shape = 'u32[144,128]{1,0:T(1,128)}', space=vmem, size = 0x12000, scoped, tag = 'internal scratch']
  %s0 = inlined_call_operand.vmem [shape: f32[32,128], index: 0, kind: input, shape index: {}]
  %s1 = inlined_call_operand.vmem [shape: f32[32,128], index: 1, kind: input, shape index: {}]
  %s2 = inlined_call_operand.vmem [shape: f32[1,32,128], index: 2, kind: output, shape index: {}]
  %s3 = sld [smem:[#allocation0]]
  $region30: #{_l1_loss_unweighted.1} parent=0
    _
  %s5 = ssub.s32 1, %s3
  %s6 = scalar_select 0, %s5, %s3
  // Predicated region
  $region2: #{_l1_loss_unweighted.1} parent=0 // pred_check
    _
  $region3: #{_l1_loss_unweighted.1} parent=0 // pred_check_branch
    %8 = sbr.rel (0) target = $region5
  $region4: #{_l1_loss_unweighted.1} parent=0 // pred_region
    _
  $region5: #{_l1_loss_unweighted.1} parent=0 // pred_fallthru
    _
  // Predicated region
  $region6: #{_l1_loss_unweighted.1} parent=0 // pred_check
    _
  $region7: #{_l1_loss_unweighted.1} parent=0 // pred_check_branch
    %10 = sbr.rel (0) target = $region9
  $region8: #{_l1_loss_unweighted.1} parent=0 // pred_region
    _
  $region9: #{_l1_loss_unweighted.1} parent=0 // pred_fallthru
    _
  %p11 = scmp.eq.s32.totalorder 0, 0
  // Predicated region
  $region10: #{_l1_loss_unweighted.1} parent=0 // pred_check
    %p12 = pneg %p11
  $region11: #{_l1_loss_unweighted.1} parent=0 // pred_check_branch
    %14 = sbr.rel (%p12) target = $region13
  $region12: #{_l1_loss_unweighted.1} parent=0 // pred_region
    %15 = vst [vmem:[%s2] sm:$0xff] 0.0
    %16 = vst [vmem:[%s2 + $0x8] sm:$0xff] 0.0
    %17 = vst [vmem:[%s2 + $0x10] sm:$0xff] 0.0
    %18 = vst [vmem:[%s2 + $0x18] sm:$0xff] 0.0
  $region13: #{_l1_loss_unweighted.1} parent=0 // pred_fallthru
    _
  %s19 = smul.u32 0, 32
  %s20 = sadd.s32 %s19, 32
  %p21 = scmp.le.s32.totalorder %s20, 32
  // Predicated region
  $region14: #{_l1_loss_unweighted.1} parent=0 // pred_check
    %p22 = pneg %p21
  $region15: #{_l1_loss_unweighted.1} parent=0 // pred_check_branch
    %24 = sbr.rel (%p22) target = $region17
  $region16: #{_l1_loss_unweighted.1} parent=0 // pred_region
    %v25 = vld [vmem:[%s2] sm:$0xff]
    %v26 = vld [vmem:[%s2 + $0x8] sm:$0xff]
    %v27 = vld [vmem:[%s2 + $0x10] sm:$0xff]
    %v28 = vld [vmem:[%s2 + $0x18] sm:$0xff]
    %v29 = vld [vmem:[%s0] sm:$0xff]
    %v30 = vld [vmem:[%s0 + $0x8] sm:$0xff]
    %v31 = vld [vmem:[%s0 + $0x10] sm:$0xff]
    %v32 = vld [vmem:[%s0 + $0x18] sm:$0xff]
    %v33 = vld [vmem:[%s1] sm:$0xff]
    %v34 = vld [vmem:[%s1 + $0x8] sm:$0xff]
    %v35 = vld [vmem:[%s1 + $0x10] sm:$0xff]
    %v36 = vld [vmem:[%s1 + $0x18] sm:$0xff]
    %v37 = vsub.f32 %v29, %v33
    %v38 = vsub.f32 %v30, %v34
    %v39 = vsub.f32 %v31, %v35
    %v40 = vsub.f32 %v32, %v36
    %v41 = vand.u32 2147483647, %v37
    %v42 = vand.u32 2147483647, %v38
    %v43 = vand.u32 2147483647, %v39
    %v44 = vand.u32 2147483647, %v40
    %v45 = vadd.f32 %v41, 0.0
    %v46 = vadd.f32 %v42, 0.0
    %v47 = vadd.f32 %v43, 0.0
    %v48 = vadd.f32 %v44, 0.0
    %v49 = vadd.f32 %v45, 0.0
    %v50 = vadd.f32 %v46, 0.0
    %v51 = vadd.f32 %v47, 0.0
    %v52 = vadd.f32 %v48, 0.0
    %v53 = vadd.f32 %v25, %v49
    %v54 = vadd.f32 %v26, %v50
    %v55 = vadd.f32 %v27, %v51
    %v56 = vadd.f32 %v28, %v52
    %57 = vst [vmem:[%s2] sm:$0xff] %v53
    %58 = vst [vmem:[%s2 + $0x8] sm:$0xff] %v54
    %59 = vst [vmem:[%s2 + $0x10] sm:$0xff] %v55
    %60 = vst [vmem:[%s2 + $0x18] sm:$0xff] %v56
  $region17: #{_l1_loss_unweighted.1} parent=0 // pred_fallthru
    _
  %p61 = scmp.gt.s32.totalorder %s20, 32
  // Predicated region
  $region18: #{_l1_loss_unweighted.1} parent=0 // pred_check
    %p62 = pneg %p61
  $region19: #{_l1_loss_unweighted.1} parent=0 // pred_check_branch
    %64 = sbr.rel (%p62) target = $region21
  $region20: #{_l1_loss_unweighted.1} parent=0 // pred_region
    %v65 = vlaneseq
    %v66 = vshrl.u32 %v65, 7
    %v67 = vadd.s32 %v66, 8
    %v68 = vadd.s32 %v66, 16
    %v69 = vadd.s32 %v66, 24
    %v70 = vld [vmem:[%s2] sm:$0xff]
    %v71 = vld [vmem:[%s2 + $0x8] sm:$0xff]
    %v72 = vld [vmem:[%s2 + $0x10] sm:$0xff]
    %v73 = vld [vmem:[%s2 + $0x18] sm:$0xff]
    %v74 = vld [vmem:[%s0] sm:$0xff]
    %v75 = vld [vmem:[%s0 + $0x8] sm:$0xff]
    %v76 = vld [vmem:[%s0 + $0x10] sm:$0xff]
    %v77 = vld [vmem:[%s0 + $0x18] sm:$0xff]
    %v78 = vld [vmem:[%s1] sm:$0xff]
    %v79 = vld [vmem:[%s1 + $0x8] sm:$0xff]
    %v80 = vld [vmem:[%s1 + $0x10] sm:$0xff]
    %v81 = vld [vmem:[%s1 + $0x18] sm:$0xff]
    %v82 = vsub.f32 %v74, %v78
    %v83 = vsub.f32 %v75, %v79
    %v84 = vsub.f32 %v76, %v80
    %v85 = vsub.f32 %v77, %v81
    %v86 = vand.u32 2147483647, %v82
    %v87 = vand.u32 2147483647, %v83
    %v88 = vand.u32 2147483647, %v84
    %v89 = vand.u32 2147483647, %v85
    %s90 = ssub.s32 32, %s19
    %s91 = ssub.s32 %s90, 0
    %v92 = vstv %s91
    %vm93 = vcmp.lt.s32.totalorder %v66, %v92
    %vm94 = vcmp.lt.s32.totalorder %v67, %v92
    %vm95 = vcmp.lt.s32.totalorder %v68, %v92
    %vm96 = vcmp.lt.s32.totalorder %v69, %v92
    %v97 = vsel %vm93, %v86, 0.0
    %v98 = vsel %vm94, %v87, 0.0
    %v99 = vsel %vm95, %v88, 0.0
    %v100 = vsel %vm96, %v89, 0.0
    %v101 = vadd.f32 %v97, 0.0
    %v102 = vadd.f32 %v98, 0.0
    %v103 = vadd.f32 %v99, 0.0
    %v104 = vadd.f32 %v100, 0.0
    %v105 = vadd.f32 %v101, 0.0
    %v106 = vadd.f32 %v102, 0.0
    %v107 = vadd.f32 %v103, 0.0
    %v108 = vadd.f32 %v104, 0.0
    %v109 = vadd.f32 %v70, %v105
    %v110 = vadd.f32 %v71, %v106
    %v111 = vadd.f32 %v72, %v107
    %v112 = vadd.f32 %v73, %v108
    %113 = vst [vmem:[%s2] sm:$0xff] %v109
    %114 = vst [vmem:[%s2 + $0x8] sm:$0xff] %v110
    %115 = vst [vmem:[%s2 + $0x10] sm:$0xff] %v111
    %116 = vst [vmem:[%s2 + $0x18] sm:$0xff] %v112
  $region21: #{_l1_loss_unweighted.1} parent=0 // pred_fallthru
    _
  // Predicated region
  $region22: #{_l1_loss_unweighted.1} parent=0 // pred_check
    _
  $region23: #{_l1_loss_unweighted.1} parent=0 // pred_check_branch
    %118 = sbr.rel (0) target = $region25
  $region24: #{_l1_loss_unweighted.1} parent=0 // pred_region
    _
  $region25: #{_l1_loss_unweighted.1} parent=0 // pred_fallthru
    _
  // Predicated region
  $region26: #{_l1_loss_unweighted.1} parent=0 // pred_check
    _
  $region27: #{_l1_loss_unweighted.1} parent=0 // pred_check_branch
    %120 = sbr.rel (0) target = $region29
  $region28: #{_l1_loss_unweighted.1} parent=0 // pred_region
    _
  $region29: #{_l1_loss_unweighted.1} parent=0 // pred_fallthru
    _

</llo_original>
